<compile_context>
chip_gen: v7x
topology: tpu7x:2x2x1
jax: 0.10.0
libtpu: 0.0.40
codegen_flags: <defaults>
</compile_context>

<pallas_src>
import functools

import jax
import jax.numpy as jnp
from jax.experimental import pallas as pl
from jax.experimental.pallas import tpu as pltpu


def dsconv_kernel(x_ref, wdw_ref, wpw_ref, bnp_ref, out_ref,
                  *, N, C, O, H, W, eps):
    """Fused depthwise-conv + BN + ReLU + pointwise-conv + BN + ReLU.

    x_ref   : (N*C, H*W)     input, one image plane per row (lane-dense)
    wdw_ref : (C, 9)         depthwise 3x3 taps per channel
    wpw_ref : (O, C)         pointwise weight
    bnp_ref : (max(C,O), 4)  packed BN params: [gdw | bdw | gpw | bpw]
    out_ref : (N, O, H*W)
    """
    HW = H * W
    inv_nhw = 1.0 / float(N * HW)

    x = x_ref[...]                                          # (N*C, HW) f32

    # Per-row depthwise taps: broadcast the (C, 9) taps over the batch once
    # (tiny: N concatenated 8x9 tiles), instead of a wrapper-side jnp.tile.
    wdw = wdw_ref[...]                                      # (C, 9)
    w_rows = wdw if N == 1 else jnp.concatenate([wdw] * N, axis=0)   # (N*C, 9)

    # Lane coordinates (h, w) of the flattened H*W lane axis, for the border
    # masks (generated in-kernel; no (9,HW) mask input / DMA).
    lane = jax.lax.broadcasted_iota(jnp.int32, (1, HW), 1)
    if (W & (W - 1)) == 0:                                  # power-of-two W
        ww = lane & (W - 1)
        hh = lane >> (W.bit_length() - 1)
    else:
        hh = lane // W
        ww = lane - hh * W

    # ---- depthwise 3x3, stride 1, pad 1: lane rolls (XLU) + VPU MACs -------
    # roll by -(dy*W+dx) brings source pixel (h+dy, w+dx) onto lane (h, w);
    # the border mask zeroes both out-of-image taps and roll wrap-around.
    # Center tap (dy=dx=0) seeds the accumulator: always in-bounds -> no mask,
    # no zero-fill, no extra add pass.
    acc = x * w_rows[:, 4:5]
    for ky in range(3):
        for kx in range(3):
            if ky == 1 and kx == 1:
                continue
            dy, dx = ky - 1, kx - 1
            k = ky * 3 + kx
            d = dy * W + dx
            shifted = pltpu.roll(x, shift=(-d) % HW, axis=1)
            # Only the constraints that can actually fail for this tap.
            cond = None
            for c_ in ((hh >= -dy) if dy < 0 else None,
                       (hh < H - dy) if dy > 0 else None,
                       (ww >= -dx) if dx < 0 else None,
                       (ww < W - dx) if dx > 0 else None):
                if c_ is not None:
                    cond = c_ if cond is None else (cond & c_)
            mask = cond.astype(jnp.float32)                 # (1, HW)
            acc = acc + (shifted * mask) * w_rows[:, k:k + 1]

    # ---- BN_dw (batch stats, two-pass centered variance) + ReLU -------------
    acc3 = acc.reshape(N, C, HW)                            # tile-aligned split
    mu = jnp.sum(jnp.sum(acc3, axis=2, keepdims=True), axis=0,
                 keepdims=True) * inv_nhw                   # (1, C, 1)
    dcen = acc3 - mu
    var = jnp.sum(jnp.sum(dcen * dcen, axis=2, keepdims=True), axis=0,
                  keepdims=True) * inv_nhw                  # (1, C, 1)
    gdw = bnp_ref[0:C, 0:1].reshape(1, C, 1)
    bdw = bnp_ref[0:C, 1:2].reshape(1, C, 1)
    scale = gdw * jax.lax.rsqrt(var + eps)
    y3 = jnp.maximum(dcen * scale + bdw, 0.0)               # (N, C, HW)

    # ---- pointwise 1x1: K = C is tiny -> contract on the VPU in full f32 ----
    # Seed with the c == 0 term (no (N,O,HW) zero fill + add pass).
    wpw = wpw_ref[...]                                      # (O, C)
    z3 = y3[:, 0:1, :] * wpw[:, 0:1].reshape(1, O, 1)
    for c in range(1, C):
        z3 = z3 + y3[:, c:c + 1, :] * wpw[:, c:c + 1].reshape(1, O, 1)

    # ---- BN_pw (batch stats, two-pass) + ReLU; lane-dense store --------------
    mu2 = jnp.sum(jnp.sum(z3, axis=2, keepdims=True), axis=0,
                  keepdims=True) * inv_nhw                  # (1, O, 1)
    zc = z3 - mu2
    var2 = jnp.sum(jnp.sum(zc * zc, axis=2, keepdims=True), axis=0,
                   keepdims=True) * inv_nhw                 # (1, O, 1)
    gpw = bnp_ref[0:O, 2:3].reshape(1, O, 1)
    bpw = bnp_ref[0:O, 3:4].reshape(1, O, 1)
    scale2 = gpw * jax.lax.rsqrt(var2 + eps)
    out_ref[...] = jnp.maximum(zc * scale2 + bpw, 0.0)      # (N, O, HW)


@functools.partial(jax.jit, static_argnames=("stride", "eps"))
def dsconv_forward(x_nchw, dw_w, pw_w, gdw, bdw, gpw, bpw,
                   *, stride=1, eps=1e-5):
    """NCHW in / NCHW out.  Wrapper does only free reshapes + tiny param packing."""
    N, C, H, W = x_nchw.shape
    O = pw_w.shape[0]
    if stride != 1:
        # TODO(synk): stride>1 (lane-subsampled depthwise) not implemented here.
        raise NotImplementedError("packed-lane DSConv kernel supports stride=1")
    HW = H * W
    P = max(C, O)

    # glue: contiguous reshapes (free) + small parameter packing (4 inputs total)
    x2 = x_nchw.reshape(N * C, HW).astype(jnp.float32)      # (N*C, HW)
    wdw2 = dw_w.reshape(C, 9).astype(jnp.float32)           # (C, 9)
    wpw2 = pw_w.reshape(O, C).astype(jnp.float32)           # (O, C)
    bn_pack = jnp.zeros((P, 4), jnp.float32)
    bn_pack = bn_pack.at[:C, 0].set(gdw.astype(jnp.float32))
    bn_pack = bn_pack.at[:C, 1].set(bdw.astype(jnp.float32))
    bn_pack = bn_pack.at[:O, 2].set(gpw.astype(jnp.float32))
    bn_pack = bn_pack.at[:O, 3].set(bpw.astype(jnp.float32))

    kernel = functools.partial(dsconv_kernel, N=N, C=C, O=O, H=H, W=W, eps=eps)

    # Training-mode BatchNorm couples the whole batch, and at these shapes all
    # buffers are a few tens of KiB, so a single grid step holds everything.
    out3 = pl.pallas_call(
        kernel,
        out_shape=jax.ShapeDtypeStruct((N, O, HW), jnp.float32),
        grid=(1,),
        in_specs=[
            pl.BlockSpec((N * C, HW), lambda i: (0, 0)),
            pl.BlockSpec((C, 9), lambda i: (0, 0)),
            pl.BlockSpec((O, C), lambda i: (0, 0)),
            pl.BlockSpec((P, 4), lambda i: (0, 0)),
        ],
        out_specs=pl.BlockSpec((N, O, HW), lambda i: (0, 0, 0)),
        compiler_params=pltpu.CompilerParams(
            dimension_semantics=("arbitrary",)),
    )(x2, wdw2, wpw2, bn_pack)

    return out3.reshape(N, O, H, W)                         # free reshape


def dsconv_reference(x_nchw, dw_w, pw_w, gdw, bdw, gpw, bpw,
                     *, stride=1, eps=1e-5):
    """Pure-JAX reference (XLA convs) mirroring the PyTorch forward."""
    C = dw_w.shape[0]

    def bn_relu(t, g, b):
        mu = t.mean(axis=(0, 2, 3), keepdims=True)
        var = t.var(axis=(0, 2, 3), keepdims=True)          # biased, like train mode
        t = (t - mu) / jnp.sqrt(var + eps) * g.reshape(1, -1, 1, 1) \
            + b.reshape(1, -1, 1, 1)
        return jnp.maximum(t, 0.0)

    y = jax.lax.conv_general_dilated(
        x_nchw, dw_w, window_strides=(stride, stride),
        padding=((1, 1), (1, 1)), feature_group_count=C,
        dimension_numbers=("NCHW", "OIHW", "NCHW"),
        precision=jax.lax.Precision.HIGHEST)
    y = bn_relu(y, gdw, bdw)
    z = jax.lax.conv_general_dilated(
        y, pw_w, window_strides=(1, 1), padding="VALID",
        dimension_numbers=("NCHW", "OIHW", "NCHW"),
        precision=jax.lax.Precision.HIGHEST)
    return bn_relu(z, gpw, bpw)


if __name__ == "__main__":
    # DSConv(in_chs=8, out_chs=16, stride=1, ratio=1.0)
    in_chs, out_chs, stride, ratio = 8, 16, 1, 1.0
    C = int(ratio * in_chs)
    O = int(ratio * out_chs)
    N, H, W = 2, 16, 16

    key = jax.random.PRNGKey(0)
    ks = jax.random.split(key, 7)
    x = jax.random.normal(ks[0], (N, C, H, W), jnp.float32)
    # deterministic synthetic parameters (shapes from the module __init__)
    dw_w = 0.3 * jax.random.normal(ks[1], (C, 1, 3, 3), jnp.float32)
    pw_w = 0.3 * jax.random.normal(ks[2], (O, C, 1, 1), jnp.float32)
    # PyTorch BN defaults are gamma=1, beta=0; perturb slightly so the affine
    # path is exercised (still deterministic).
    gdw = 1.0 + 0.1 * jax.random.normal(ks[3], (C,), jnp.float32)
    bdw = 0.1 * jax.random.normal(ks[4], (C,), jnp.float32)
    gpw = 1.0 + 0.1 * jax.random.normal(ks[5], (O,), jnp.float32)
    bpw = 0.1 * jax.random.normal(ks[6], (O,), jnp.float32)

    out = dsconv_forward(x, dw_w, pw_w, gdw, bdw, gpw, bpw,
                         stride=stride, eps=1e-5)
    out = jax.block_until_ready(out)

    ref = dsconv_reference(x, dw_w, pw_w, gdw, bdw, gpw, bpw,
                           stride=stride, eps=1e-5)
    err = float(jnp.max(jnp.abs(out - ref)))
    assert out.shape == (N, O, H, W), out.shape
    assert err < 5e-3, f"max abs error vs reference: {err}"

    print("KERNEL_OK")
</pallas_src>

<mosaic_0001>
module attributes {stable_mosaic.version = 11 : i64} {
  func.func @dsconv_kernel(%arg0: i32, %arg1: memref<16x256xf32, #tpu.memory_space<vmem>>, %arg2: memref<8x9xf32, #tpu.memory_space<vmem>>, %arg3: memref<16x8xf32, #tpu.memory_space<vmem>>, %arg4: memref<16x4xf32, #tpu.memory_space<vmem>>, %arg5: memref<2x16x256xf32, #tpu.memory_space<vmem>>) attributes {dimension_semantics = [#tpu.dimension_semantics<arbitrary>], iteration_bounds = array<i64: 1>, scalar_prefetch = 0 : i64, scratch_operands = 0 : i64, tpu.core_type = #tpu.core_type<tc>, window_params = [{pipeline_mode = #tpu.pipeline_mode<synchronous>, transform_indices = @transform_0, window_bounds = array<i64: 16, 256>}, {pipeline_mode = #tpu.pipeline_mode<synchronous>, transform_indices = @transform_1, window_bounds = array<i64: 8, 9>}, {pipeline_mode = #tpu.pipeline_mode<synchronous>, transform_indices = @transform_2, window_bounds = array<i64: 16, 8>}, {pipeline_mode = #tpu.pipeline_mode<synchronous>, transform_indices = @transform_3, window_bounds = array<i64: 16, 4>}, {pipeline_mode = #tpu.pipeline_mode<synchronous>, transform_indices = @transform_4, window_bounds = array<i64: 2, 16, 256>}]} {
    %c0 = arith.constant 0 : index
    %c0_0 = arith.constant 0 : index
    %0 = vector.load %arg1[%c0, %c0_0] : memref<16x256xf32, #tpu.memory_space<vmem>>, vector<16x256xf32>
    %c0_1 = arith.constant 0 : index
    %c0_2 = arith.constant 0 : index
    %1 = vector.load %arg2[%c0_1, %c0_2] : memref<8x9xf32, #tpu.memory_space<vmem>>, vector<8x9xf32>
    %2 = tpu.concatenate %1, %1 in 0 : vector<8x9xf32>, vector<8x9xf32> -> vector<16x9xf32>
    %3 = tpu.iota {dimensions = array<i32: 1>} : vector<1x256xi32>
    %c15_i32 = arith.constant 15 : i32
    %4 = vector.broadcast %c15_i32 : i32 to vector<1x256xi32>
    %5 = arith.andi %3, %4 : vector<1x256xi32>
    %c4_i32 = arith.constant 4 : i32
    %6 = vector.broadcast %c4_i32 : i32 to vector<1x256xi32>
    %7 = arith.shrsi %3, %6 : vector<1x256xi32>
    %8 = vector.extract_strided_slice %2 {offsets = [0, 4], sizes = [16, 1], strides = [1, 1]} : vector<16x9xf32> to vector<16x1xf32>
    %9 = vector.broadcast %8 : vector<16x1xf32> to vector<16x256xf32>
    %10 = arith.mulf %0, %9 : vector<16x256xf32>
    %c17_i32 = arith.constant 17 : i32
    %11 = tpu.dynamic_rotate %0 by %c17_i32 dim 1 : vector<16x256xf32>, i32 -> vector<16x256xf32>
    %c1_i32 = arith.constant 1 : i32
    %12 = vector.broadcast %c1_i32 : i32 to vector<1x256xi32>
    %13 = arith.cmpi sge, %7, %12 : vector<1x256xi32>
    %c1_i32_3 = arith.constant 1 : i32
    %14 = vector.broadcast %c1_i32_3 : i32 to vector<1x256xi32>
    %15 = arith.cmpi sge, %5, %14 : vector<1x256xi32>
    %16 = arith.andi %13, %15 : vector<1x256xi1>
    %17 = arith.extui %16 : vector<1x256xi1> to vector<1x256xi32>
    %18 = arith.sitofp %17 : vector<1x256xi32> to vector<1x256xf32>
    %19 = vector.broadcast %18 : vector<1x256xf32> to vector<16x256xf32>
    %20 = arith.mulf %11, %19 : vector<16x256xf32>
    %21 = vector.extract_strided_slice %2 {offsets = [0, 0], sizes = [16, 1], strides = [1, 1]} : vector<16x9xf32> to vector<16x1xf32>
    %22 = vector.broadcast %21 : vector<16x1xf32> to vector<16x256xf32>
    %23 = arith.mulf %20, %22 : vector<16x256xf32>
    %24 = arith.addf %10, %23 : vector<16x256xf32>
    %c16_i32 = arith.constant 16 : i32
    %25 = tpu.dynamic_rotate %0 by %c16_i32 dim 1 : vector<16x256xf32>, i32 -> vector<16x256xf32>
    %c1_i32_4 = arith.constant 1 : i32
    %26 = vector.broadcast %c1_i32_4 : i32 to vector<1x256xi32>
    %27 = arith.cmpi sge, %7, %26 : vector<1x256xi32>
    %28 = arith.extui %27 : vector<1x256xi1> to vector<1x256xi32>
    %29 = arith.sitofp %28 : vector<1x256xi32> to vector<1x256xf32>
    %30 = vector.broadcast %29 : vector<1x256xf32> to vector<16x256xf32>
    %31 = arith.mulf %25, %30 : vector<16x256xf32>
    %32 = vector.extract_strided_slice %2 {offsets = [0, 1], sizes = [16, 1], strides = [1, 1]} : vector<16x9xf32> to vector<16x1xf32>
    %33 = vector.broadcast %32 : vector<16x1xf32> to vector<16x256xf32>
    %34 = arith.mulf %31, %33 : vector<16x256xf32>
    %35 = arith.addf %24, %34 : vector<16x256xf32>
    %c15_i32_5 = arith.constant 15 : i32
    %36 = tpu.dynamic_rotate %0 by %c15_i32_5 dim 1 : vector<16x256xf32>, i32 -> vector<16x256xf32>
    %c1_i32_6 = arith.constant 1 : i32
    %37 = vector.broadcast %c1_i32_6 : i32 to vector<1x256xi32>
    %38 = arith.cmpi sge, %7, %37 : vector<1x256xi32>
    %c15_i32_7 = arith.constant 15 : i32
    %39 = vector.broadcast %c15_i32_7 : i32 to vector<1x256xi32>
    %40 = arith.cmpi slt, %5, %39 : vector<1x256xi32>
    %41 = arith.andi %38, %40 : vector<1x256xi1>
    %42 = arith.extui %41 : vector<1x256xi1> to vector<1x256xi32>
    %43 = arith.sitofp %42 : vector<1x256xi32> to vector<1x256xf32>
    %44 = vector.broadcast %43 : vector<1x256xf32> to vector<16x256xf32>
    %45 = arith.mulf %36, %44 : vector<16x256xf32>
    %46 = vector.extract_strided_slice %2 {offsets = [0, 2], sizes = [16, 1], strides = [1, 1]} : vector<16x9xf32> to vector<16x1xf32>
    %47 = vector.broadcast %46 : vector<16x1xf32> to vector<16x256xf32>
    %48 = arith.mulf %45, %47 : vector<16x256xf32>
    %49 = arith.addf %35, %48 : vector<16x256xf32>
    %c1_i32_8 = arith.constant 1 : i32
    %50 = tpu.dynamic_rotate %0 by %c1_i32_8 dim 1 : vector<16x256xf32>, i32 -> vector<16x256xf32>
    %c1_i32_9 = arith.constant 1 : i32
    %51 = vector.broadcast %c1_i32_9 : i32 to vector<1x256xi32>
    %52 = arith.cmpi sge, %5, %51 : vector<1x256xi32>
    %53 = arith.extui %52 : vector<1x256xi1> to vector<1x256xi32>
    %54 = arith.sitofp %53 : vector<1x256xi32> to vector<1x256xf32>
    %55 = vector.broadcast %54 : vector<1x256xf32> to vector<16x256xf32>
    %56 = arith.mulf %50, %55 : vector<16x256xf32>
    %57 = vector.extract_strided_slice %2 {offsets = [0, 3], sizes = [16, 1], strides = [1, 1]} : vector<16x9xf32> to vector<16x1xf32>
    %58 = vector.broadcast %57 : vector<16x1xf32> to vector<16x256xf32>
    %59 = arith.mulf %56, %58 : vector<16x256xf32>
    %60 = arith.addf %49, %59 : vector<16x256xf32>
    %c255_i32 = arith.constant 255 : i32
    %61 = tpu.dynamic_rotate %0 by %c255_i32 dim 1 : vector<16x256xf32>, i32 -> vector<16x256xf32>
    %c15_i32_10 = arith.constant 15 : i32
    %62 = vector.broadcast %c15_i32_10 : i32 to vector<1x256xi32>
    %63 = arith.cmpi slt, %5, %62 : vector<1x256xi32>
    %64 = arith.extui %63 : vector<1x256xi1> to vector<1x256xi32>
    %65 = arith.sitofp %64 : vector<1x256xi32> to vector<1x256xf32>
    %66 = vector.broadcast %65 : vector<1x256xf32> to vector<16x256xf32>
    %67 = arith.mulf %61, %66 : vector<16x256xf32>
    %68 = vector.extract_strided_slice %2 {offsets = [0, 5], sizes = [16, 1], strides = [1, 1]} : vector<16x9xf32> to vector<16x1xf32>
    %69 = vector.broadcast %68 : vector<16x1xf32> to vector<16x256xf32>
    %70 = arith.mulf %67, %69 : vector<16x256xf32>
    %71 = arith.addf %60, %70 : vector<16x256xf32>
    %c241_i32 = arith.constant 241 : i32
    %72 = tpu.dynamic_rotate %0 by %c241_i32 dim 1 : vector<16x256xf32>, i32 -> vector<16x256xf32>
    %c15_i32_11 = arith.constant 15 : i32
    %73 = vector.broadcast %c15_i32_11 : i32 to vector<1x256xi32>
    %74 = arith.cmpi slt, %7, %73 : vector<1x256xi32>
    %c1_i32_12 = arith.constant 1 : i32
    %75 = vector.broadcast %c1_i32_12 : i32 to vector<1x256xi32>
    %76 = arith.cmpi sge, %5, %75 : vector<1x256xi32>
    %77 = arith.andi %74, %76 : vector<1x256xi1>
    %78 = arith.extui %77 : vector<1x256xi1> to vector<1x256xi32>
    %79 = arith.sitofp %78 : vector<1x256xi32> to vector<1x256xf32>
    %80 = vector.broadcast %79 : vector<1x256xf32> to vector<16x256xf32>
    %81 = arith.mulf %72, %80 : vector<16x256xf32>
    %82 = vector.extract_strided_slice %2 {offsets = [0, 6], sizes = [16, 1], strides = [1, 1]} : vector<16x9xf32> to vector<16x1xf32>
    %83 = vector.broadcast %82 : vector<16x1xf32> to vector<16x256xf32>
    %84 = arith.mulf %81, %83 : vector<16x256xf32>
    %85 = arith.addf %71, %84 : vector<16x256xf32>
    %c240_i32 = arith.constant 240 : i32
    %86 = tpu.dynamic_rotate %0 by %c240_i32 dim 1 : vector<16x256xf32>, i32 -> vector<16x256xf32>
    %c15_i32_13 = arith.constant 15 : i32
    %87 = vector.broadcast %c15_i32_13 : i32 to vector<1x256xi32>
    %88 = arith.cmpi slt, %7, %87 : vector<1x256xi32>
    %89 = arith.extui %88 : vector<1x256xi1> to vector<1x256xi32>
    %90 = arith.sitofp %89 : vector<1x256xi32> to vector<1x256xf32>
    %91 = vector.broadcast %90 : vector<1x256xf32> to vector<16x256xf32>
    %92 = arith.mulf %86, %91 : vector<16x256xf32>
    %93 = vector.extract_strided_slice %2 {offsets = [0, 7], sizes = [16, 1], strides = [1, 1]} : vector<16x9xf32> to vector<16x1xf32>
    %94 = vector.broadcast %93 : vector<16x1xf32> to vector<16x256xf32>
    %95 = arith.mulf %92, %94 : vector<16x256xf32>
    %96 = arith.addf %85, %95 : vector<16x256xf32>
    %c239_i32 = arith.constant 239 : i32
    %97 = tpu.dynamic_rotate %0 by %c239_i32 dim 1 : vector<16x256xf32>, i32 -> vector<16x256xf32>
    %c15_i32_14 = arith.constant 15 : i32
    %98 = vector.broadcast %c15_i32_14 : i32 to vector<1x256xi32>
    %99 = arith.cmpi slt, %7, %98 : vector<1x256xi32>
    %c15_i32_15 = arith.constant 15 : i32
    %100 = vector.broadcast %c15_i32_15 : i32 to vector<1x256xi32>
    %101 = arith.cmpi slt, %5, %100 : vector<1x256xi32>
    %102 = arith.andi %99, %101 : vector<1x256xi1>
    %103 = arith.extui %102 : vector<1x256xi1> to vector<1x256xi32>
    %104 = arith.sitofp %103 : vector<1x256xi32> to vector<1x256xf32>
    %105 = vector.broadcast %104 : vector<1x256xf32> to vector<16x256xf32>
    %106 = arith.mulf %97, %105 : vector<16x256xf32>
    %107 = vector.extract_strided_slice %2 {offsets = [0, 8], sizes = [16, 1], strides = [1, 1]} : vector<16x9xf32> to vector<16x1xf32>
    %108 = vector.broadcast %107 : vector<16x1xf32> to vector<16x256xf32>
    %109 = arith.mulf %106, %108 : vector<16x256xf32>
    %110 = arith.addf %96, %109 : vector<16x256xf32>
    %111 = vector.shape_cast %110 : vector<16x256xf32> to vector<2x8x256xf32>
    %cst = arith.constant dense<0.000000e+00> : vector<2x8xf32>
    %112 = vector.multi_reduction <add>, %111, %cst [2] : vector<2x8x256xf32> to vector<2x8xf32>
    %113 = vector.shape_cast %112 : vector<2x8xf32> to vector<2x8x1xf32>
    %cst_16 = arith.constant dense<0.000000e+00> : vector<8x1xf32>
    %114 = vector.multi_reduction <add>, %113, %cst_16 [0] : vector<2x8x1xf32> to vector<8x1xf32>
    %115 = vector.shape_cast %114 : vector<8x1xf32> to vector<1x8x1xf32>
    %cst_17 = arith.constant 0.001953125 : f32
    %116 = vector.broadcast %cst_17 : f32 to vector<1x8x1xf32>
    %117 = arith.mulf %115, %116 : vector<1x8x1xf32>
    %118 = vector.broadcast %117 : vector<1x8x1xf32> to vector<2x8x256xf32>
    %119 = arith.subf %111, %118 : vector<2x8x256xf32>
    %120 = arith.mulf %119, %119 : vector<2x8x256xf32>
    %cst_18 = arith.constant dense<0.000000e+00> : vector<2x8xf32>
    %121 = vector.multi_reduction <add>, %120, %cst_18 [2] : vector<2x8x256xf32> to vector<2x8xf32>
    %122 = vector.shape_cast %121 : vector<2x8xf32> to vector<2x8x1xf32>
    %cst_19 = arith.constant dense<0.000000e+00> : vector<8x1xf32>
    %123 = vector.multi_reduction <add>, %122, %cst_19 [0] : vector<2x8x1xf32> to vector<8x1xf32>
    %124 = vector.shape_cast %123 : vector<8x1xf32> to vector<1x8x1xf32>
    %cst_20 = arith.constant 0.001953125 : f32
    %125 = vector.broadcast %cst_20 : f32 to vector<1x8x1xf32>
    %126 = arith.mulf %124, %125 : vector<1x8x1xf32>
    %c0_21 = arith.constant 0 : index
    %c0_22 = arith.constant 0 : index
    %127 = vector.load %arg4[%c0_21, %c0_22] : memref<16x4xf32, #tpu.memory_space<vmem>>, vector<8x1xf32>
    %128 = vector.shape_cast %127 : vector<8x1xf32> to vector<1x8x1xf32>
    %c0_23 = arith.constant 0 : index
    %c1 = arith.constant 1 : index
    %129 = vector.load %arg4[%c0_23, %c1] : memref<16x4xf32, #tpu.memory_space<vmem>>, vector<8x1xf32>
    %130 = vector.shape_cast %129 : vector<8x1xf32> to vector<1x8x1xf32>
    %cst_24 = arith.constant 9.99999974E-6 : f32
    %131 = vector.broadcast %cst_24 : f32 to vector<1x8x1xf32>
    %132 = arith.addf %126, %131 : vector<1x8x1xf32>
    %133 = math.rsqrt %132 : vector<1x8x1xf32>
    %134 = arith.mulf %128, %133 : vector<1x8x1xf32>
    %135 = vector.broadcast %134 : vector<1x8x1xf32> to vector<2x8x256xf32>
    %136 = arith.mulf %119, %135 : vector<2x8x256xf32>
    %137 = vector.broadcast %130 : vector<1x8x1xf32> to vector<2x8x256xf32>
    %138 = arith.addf %136, %137 : vector<2x8x256xf32>
    %cst_25 = arith.constant 0.000000e+00 : f32
    %139 = vector.broadcast %cst_25 : f32 to vector<2x8x256xf32>
    %140 = arith.maximumf %138, %139 : vector<2x8x256xf32>
    %c0_26 = arith.constant 0 : index
    %c0_27 = arith.constant 0 : index
    %141 = vector.load %arg3[%c0_26, %c0_27] : memref<16x8xf32, #tpu.memory_space<vmem>>, vector<16x8xf32>
    %142 = vector.extract_strided_slice %140 {offsets = [0, 0, 0], sizes = [2, 1, 256], strides = [1, 1, 1]} : vector<2x8x256xf32> to vector<2x1x256xf32>
    %143 = vector.extract_strided_slice %141 {offsets = [0, 0], sizes = [16, 1], strides = [1, 1]} : vector<16x8xf32> to vector<16x1xf32>
    %144 = vector.shape_cast %143 : vector<16x1xf32> to vector<1x16x1xf32>
    %145 = vector.broadcast %142 : vector<2x1x256xf32> to vector<2x16x256xf32>
    %146 = vector.broadcast %144 : vector<1x16x1xf32> to vector<2x16x256xf32>
    %147 = arith.mulf %145, %146 : vector<2x16x256xf32>
    %148 = vector.extract_strided_slice %140 {offsets = [0, 1, 0], sizes = [2, 1, 256], strides = [1, 1, 1]} : vector<2x8x256xf32> to vector<2x1x256xf32>
    %149 = vector.extract_strided_slice %141 {offsets = [0, 1], sizes = [16, 1], strides = [1, 1]} : vector<16x8xf32> to vector<16x1xf32>
    %150 = vector.shape_cast %149 : vector<16x1xf32> to vector<1x16x1xf32>
    %151 = vector.broadcast %148 : vector<2x1x256xf32> to vector<2x16x256xf32>
    %152 = vector.broadcast %150 : vector<1x16x1xf32> to vector<2x16x256xf32>
    %153 = arith.mulf %151, %152 : vector<2x16x256xf32>
    %154 = arith.addf %147, %153 : vector<2x16x256xf32>
    %155 = vector.extract_strided_slice %140 {offsets = [0, 2, 0], sizes = [2, 1, 256], strides = [1, 1, 1]} : vector<2x8x256xf32> to vector<2x1x256xf32>
    %156 = vector.extract_strided_slice %141 {offsets = [0, 2], sizes = [16, 1], strides = [1, 1]} : vector<16x8xf32> to vector<16x1xf32>
    %157 = vector.shape_cast %156 : vector<16x1xf32> to vector<1x16x1xf32>
    %158 = vector.broadcast %155 : vector<2x1x256xf32> to vector<2x16x256xf32>
    %159 = vector.broadcast %157 : vector<1x16x1xf32> to vector<2x16x256xf32>
    %160 = arith.mulf %158, %159 : vector<2x16x256xf32>
    %161 = arith.addf %154, %160 : vector<2x16x256xf32>
    %162 = vector.extract_strided_slice %140 {offsets = [0, 3, 0], sizes = [2, 1, 256], strides = [1, 1, 1]} : vector<2x8x256xf32> to vector<2x1x256xf32>
    %163 = vector.extract_strided_slice %141 {offsets = [0, 3], sizes = [16, 1], strides = [1, 1]} : vector<16x8xf32> to vector<16x1xf32>
    %164 = vector.shape_cast %163 : vector<16x1xf32> to vector<1x16x1xf32>
    %165 = vector.broadcast %162 : vector<2x1x256xf32> to vector<2x16x256xf32>
    %166 = vector.broadcast %164 : vector<1x16x1xf32> to vector<2x16x256xf32>
    %167 = arith.mulf %165, %166 : vector<2x16x256xf32>
    %168 = arith.addf %161, %167 : vector<2x16x256xf32>
    %169 = vector.extract_strided_slice %140 {offsets = [0, 4, 0], sizes = [2, 1, 256], strides = [1, 1, 1]} : vector<2x8x256xf32> to vector<2x1x256xf32>
    %170 = vector.extract_strided_slice %141 {offsets = [0, 4], sizes = [16, 1], strides = [1, 1]} : vector<16x8xf32> to vector<16x1xf32>
    %171 = vector.shape_cast %170 : vector<16x1xf32> to vector<1x16x1xf32>
    %172 = vector.broadcast %169 : vector<2x1x256xf32> to vector<2x16x256xf32>
    %173 = vector.broadcast %171 : vector<1x16x1xf32> to vector<2x16x256xf32>
    %174 = arith.mulf %172, %173 : vector<2x16x256xf32>
    %175 = arith.addf %168, %174 : vector<2x16x256xf32>
    %176 = vector.extract_strided_slice %140 {offsets = [0, 5, 0], sizes = [2, 1, 256], strides = [1, 1, 1]} : vector<2x8x256xf32> to vector<2x1x256xf32>
    %177 = vector.extract_strided_slice %141 {offsets = [0, 5], sizes = [16, 1], strides = [1, 1]} : vector<16x8xf32> to vector<16x1xf32>
    %178 = vector.shape_cast %177 : vector<16x1xf32> to vector<1x16x1xf32>
    %179 = vector.broadcast %176 : vector<2x1x256xf32> to vector<2x16x256xf32>
    %180 = vector.broadcast %178 : vector<1x16x1xf32> to vector<2x16x256xf32>
    %181 = arith.mulf %179, %180 : vector<2x16x256xf32>
    %182 = arith.addf %175, %181 : vector<2x16x256xf32>
    %183 = vector.extract_strided_slice %140 {offsets = [0, 6, 0], sizes = [2, 1, 256], strides = [1, 1, 1]} : vector<2x8x256xf32> to vector<2x1x256xf32>
    %184 = vector.extract_strided_slice %141 {offsets = [0, 6], sizes = [16, 1], strides = [1, 1]} : vector<16x8xf32> to vector<16x1xf32>
    %185 = vector.shape_cast %184 : vector<16x1xf32> to vector<1x16x1xf32>
    %186 = vector.broadcast %183 : vector<2x1x256xf32> to vector<2x16x256xf32>
    %187 = vector.broadcast %185 : vector<1x16x1xf32> to vector<2x16x256xf32>
    %188 = arith.mulf %186, %187 : vector<2x16x256xf32>
    %189 = arith.addf %182, %188 : vector<2x16x256xf32>
    %190 = vector.extract_strided_slice %140 {offsets = [0, 7, 0], sizes = [2, 1, 256], strides = [1, 1, 1]} : vector<2x8x256xf32> to vector<2x1x256xf32>
    %191 = vector.extract_strided_slice %141 {offsets = [0, 7], sizes = [16, 1], strides = [1, 1]} : vector<16x8xf32> to vector<16x1xf32>
    %192 = vector.shape_cast %191 : vector<16x1xf32> to vector<1x16x1xf32>
    %193 = vector.broadcast %190 : vector<2x1x256xf32> to vector<2x16x256xf32>
    %194 = vector.broadcast %192 : vector<1x16x1xf32> to vector<2x16x256xf32>
    %195 = arith.mulf %193, %194 : vector<2x16x256xf32>
    %196 = arith.addf %189, %195 : vector<2x16x256xf32>
    %cst_28 = arith.constant dense<0.000000e+00> : vector<2x16xf32>
    %197 = vector.multi_reduction <add>, %196, %cst_28 [2] : vector<2x16x256xf32> to vector<2x16xf32>
    %198 = vector.shape_cast %197 : vector<2x16xf32> to vector<2x16x1xf32>
    %cst_29 = arith.constant dense<0.000000e+00> : vector<16x1xf32>
    %199 = vector.multi_reduction <add>, %198, %cst_29 [0] : vector<2x16x1xf32> to vector<16x1xf32>
    %200 = vector.shape_cast %199 : vector<16x1xf32> to vector<1x16x1xf32>
    %cst_30 = arith.constant 0.001953125 : f32
    %201 = vector.broadcast %cst_30 : f32 to vector<1x16x1xf32>
    %202 = arith.mulf %200, %201 : vector<1x16x1xf32>
    %203 = vector.broadcast %202 : vector<1x16x1xf32> to vector<2x16x256xf32>
    %204 = arith.subf %196, %203 : vector<2x16x256xf32>
    %205 = arith.mulf %204, %204 : vector<2x16x256xf32>
    %cst_31 = arith.constant dense<0.000000e+00> : vector<2x16xf32>
    %206 = vector.multi_reduction <add>, %205, %cst_31 [2] : vector<2x16x256xf32> to vector<2x16xf32>
    %207 = vector.shape_cast %206 : vector<2x16xf32> to vector<2x16x1xf32>
    %cst_32 = arith.constant dense<0.000000e+00> : vector<16x1xf32>
    %208 = vector.multi_reduction <add>, %207, %cst_32 [0] : vector<2x16x1xf32> to vector<16x1xf32>
    %209 = vector.shape_cast %208 : vector<16x1xf32> to vector<1x16x1xf32>
    %cst_33 = arith.constant 0.001953125 : f32
    %210 = vector.broadcast %cst_33 : f32 to vector<1x16x1xf32>
    %211 = arith.mulf %209, %210 : vector<1x16x1xf32>
    %c0_34 = arith.constant 0 : index
    %c2 = arith.constant 2 : index
    %212 = vector.load %arg4[%c0_34, %c2] : memref<16x4xf32, #tpu.memory_space<vmem>>, vector<16x1xf32>
    %213 = vector.shape_cast %212 : vector<16x1xf32> to vector<1x16x1xf32>
    %c0_35 = arith.constant 0 : index
    %c3 = arith.constant 3 : index
    %214 = vector.load %arg4[%c0_35, %c3] : memref<16x4xf32, #tpu.memory_space<vmem>>, vector<16x1xf32>
    %215 = vector.shape_cast %214 : vector<16x1xf32> to vector<1x16x1xf32>
    %cst_36 = arith.constant 9.99999974E-6 : f32
    %216 = vector.broadcast %cst_36 : f32 to vector<1x16x1xf32>
    %217 = arith.addf %211, %216 : vector<1x16x1xf32>
    %218 = math.rsqrt %217 : vector<1x16x1xf32>
    %219 = arith.mulf %213, %218 : vector<1x16x1xf32>
    %220 = vector.broadcast %219 : vector<1x16x1xf32> to vector<2x16x256xf32>
    %221 = arith.mulf %204, %220 : vector<2x16x256xf32>
    %222 = vector.broadcast %215 : vector<1x16x1xf32> to vector<2x16x256xf32>
    %223 = arith.addf %221, %222 : vector<2x16x256xf32>
    %cst_37 = arith.constant 0.000000e+00 : f32
    %224 = vector.broadcast %cst_37 : f32 to vector<2x16x256xf32>
    %225 = arith.maximumf %223, %224 : vector<2x16x256xf32>
    %c0_38 = arith.constant 0 : index
    %c0_39 = arith.constant 0 : index
    %c0_40 = arith.constant 0 : index
    %226 = vector.load %arg5[%c0_38, %c0_39, %c0_40] : memref<2x16x256xf32, #tpu.memory_space<vmem>>, vector<2x16x256xf32>
    tpu.vector_store %arg5[%c0_38, %c0_39, %c0_40], %225 {strides = array<i32>} : memref<2x16x256xf32, #tpu.memory_space<vmem>>, vector<2x16x256xf32>,
    return
  }
  func.func @transform_0(%arg0: i32) -> (i32, i32) {
    %c0_i32 = arith.constant 0 : i32
    %c0_i32_0 = arith.constant 0 : i32
    %c0_i32_1 = arith.constant 0 : i32
    return %c0_i32, %c0_i32_0 : i32, i32
  }
  func.func @transform_1(%arg0: i32) -> (i32, i32) {
    %c0_i32 = arith.constant 0 : i32
    %c0_i32_0 = arith.constant 0 : i32
    %c0_i32_1 = arith.constant 0 : i32
    return %c0_i32, %c0_i32_0 : i32, i32
  }
  func.func @transform_2(%arg0: i32) -> (i32, i32) {
    %c0_i32 = arith.constant 0 : i32
    %c0_i32_0 = arith.constant 0 : i32
    %c0_i32_1 = arith.constant 0 : i32
    return %c0_i32, %c0_i32_0 : i32, i32
  }
  func.func @transform_3(%arg0: i32) -> (i32, i32) {
    %c0_i32 = arith.constant 0 : i32
    %c0_i32_0 = arith.constant 0 : i32
    %c0_i32_1 = arith.constant 0 : i32
    return %c0_i32, %c0_i32_0 : i32, i32
  }
  func.func @transform_4(%arg0: i32) -> (i32, i32, i32) {
    %c0_i32 = arith.constant 0 : i32
    %c0_i32_0 = arith.constant 0 : i32
    %c0_i32_1 = arith.constant 0 : i32
    %c0_i32_2 = arith.constant 0 : i32
    return %c0_i32, %c0_i32_0, %c0_i32_1 : i32, i32, i32
  }
}

</mosaic_0001>

<llo_original>
// kernel: dsconv_forward.1
$region0: #{dsconv_forward.1}
  #allocation0 [shape = 'u32[]', space=smem, size = 0x4, offset = 0x4, fixed_abs, tag = 'smem constant byte address 0x4 - core index']
  #allocation1 [shape = 'u32[144,128]{1,0:T(1,128)}', space=vmem, size = 0x12000, scoped, tag = 'internal scratch']
  %s0 = inlined_call_operand.vmem [shape: f32[16,256], index: 0, kind: input, shape index: {}]
  %s1 = inlined_call_operand.vmem [shape: f32[8,9], index: 1, kind: input, shape index: {}]
  %s2 = inlined_call_operand.vmem [shape: f32[16,8], index: 2, kind: input, shape index: {}]
  %s3 = inlined_call_operand.vmem [shape: f32[16,4], index: 3, kind: input, shape index: {}]
  %s4 = inlined_call_operand.vmem [shape: f32[2,16,256], index: 4, kind: output, shape index: {}]
  %s5 = sld [smem:[#allocation0]]
  $region26: #{dsconv_forward.1} parent=0
    _
  %s7 = ssub.s32 1, %s5
  %s8 = scalar_select 0, %s7, %s5
  // Predicated region
  $region2: #{dsconv_forward.1} parent=0 // pred_check
    _
  $region3: #{dsconv_forward.1} parent=0 // pred_check_branch
    %10 = sbr.rel (0) target = $region5
  $region4: #{dsconv_forward.1} parent=0 // pred_region
    _
  $region5: #{dsconv_forward.1} parent=0 // pred_fallthru
    _
  // Predicated region
  $region6: #{dsconv_forward.1} parent=0 // pred_check
    _
  $region7: #{dsconv_forward.1} parent=0 // pred_check_branch
    %12 = sbr.rel (0) target = $region9
  $region8: #{dsconv_forward.1} parent=0 // pred_region
    _
  $region9: #{dsconv_forward.1} parent=0 // pred_fallthru
    _
  // Predicated region
  $region10: #{dsconv_forward.1} parent=0 // pred_check
    _
  $region11: #{dsconv_forward.1} parent=0 // pred_check_branch
    %14 = sbr.rel (0) target = $region13
  $region12: #{dsconv_forward.1} parent=0 // pred_region
    _
  $region13: #{dsconv_forward.1} parent=0 // pred_fallthru
    _
  // Predicated region
  $region14: #{dsconv_forward.1} parent=0 // pred_check
    _
  $region15: #{dsconv_forward.1} parent=0 // pred_check_branch
    %16 = sbr.rel (0) target = $region17
  $region16: #{dsconv_forward.1} parent=0 // pred_region
    _
  $region17: #{dsconv_forward.1} parent=0 // pred_fallthru
    _
  %v17 = vld [vmem:[%s0] sm:$0xff]
  %v18 = vld [vmem:[%s0 + $0x8] sm:$0xff]
  %v19 = vld [vmem:[%s0 + $0x10] sm:$0xff]
  %v20 = vld [vmem:[%s0 + $0x18] sm:$0xff]
  %v21 = vld [vmem:[%s1] sm:$0xff]
  %v22 = vlaneseq
  %v23 = vand.u32 %v22, 127
  %v24 = vadd.s32 %v23, 128
  %v25 = vand.u32 %v23, 15
  %v26 = vand.u32 %v24, 15
  %v27 = vshra.s32 %v23, 4
  %v28 = vshra.s32 %v24, 4
  %30 = vset.pattern.permute.xlu0 4
  %31 = vperm.xlu0 %30, %v21
  %v32 = vpop.permute.xlu0 %31
  %v34 = vmul.f32 %v17, %v32
  %v35 = vmul.f32 %v18, %v32
  %v36 = vmul.f32 %v19, %v32
  %v37 = vmul.f32 %v20, %v32
  %38 = vrot.lane.b32.xlu0 %v17, 17
  %v39 = vpop.permute.xlu0 %38
  %40 = vrot.lane.b32.xlu0 %v19, 17
  %v41 = vpop.permute.xlu0 %40
  %42 = vrot.lane.b32.xlu0 %v18, 17
  %v43 = vpop.permute.xlu0 %42
  %44 = vrot.lane.b32.xlu0 %v20, 17
  %v45 = vpop.permute.xlu0 %44
  %vm46 = vcmp.lt.s32.totalorder %v23, 17
  %v47 = vsel %vm46, %v39, %v43
  %v48 = vsel %vm46, %v41, %v45
  %v49 = vsel %vm46, %v43, %v39
  %v50 = vsel %vm46, %v45, %v41
  %vm51 = vcmp.ge.s32.totalorder %v27, 1
  %vm52 = vcmp.ge.s32.totalorder %v28, 1
  %vm53 = vcmp.ge.s32.totalorder %v25, 1
  %vm54 = vcmp.ge.s32.totalorder %v26, 1
  %vm55 = vmand %vm51, %vm53
  %vm56 = vmand %vm52, %vm54
  %v57 = vsel %vm55, 1, 0
  %v58 = vsel %vm56, 1, 0
  %v59 = vcvt.s32.f32 %v57
  %v60 = vcvt.s32.f32 %v58
  %v61 = vmul.f32 %v49, %v59
  %v62 = vmul.f32 %v47, %v60
  %v63 = vmul.f32 %v50, %v59
  %v64 = vmul.f32 %v48, %v60
  %65 = vset.pattern.permute.xlu0 0
  %66 = vperm.xlu0 %65, %v21
  %v67 = vpop.permute.xlu0 %66
  %v69 = vmul.f32 %v61, %v67
  %v70 = vmul.f32 %v62, %v67
  %v71 = vmul.f32 %v63, %v67
  %v72 = vmul.f32 %v64, %v67
  %v73 = vadd.f32 %v34, %v69
  %v74 = vadd.f32 %v35, %v70
  %v75 = vadd.f32 %v36, %v71
  %v76 = vadd.f32 %v37, %v72
  %77 = vrot.lane.b32.xlu0 %v17, 16
  %v78 = vpop.permute.xlu0 %77
  %79 = vrot.lane.b32.xlu0 %v19, 16
  %v80 = vpop.permute.xlu0 %79
  %81 = vrot.lane.b32.xlu0 %v18, 16
  %v82 = vpop.permute.xlu0 %81
  %83 = vrot.lane.b32.xlu0 %v20, 16
  %v84 = vpop.permute.xlu0 %83
  %vm85 = vcmp.lt.s32.totalorder %v23, 16
  %v86 = vsel %vm85, %v78, %v82
  %v87 = vsel %vm85, %v80, %v84
  %v88 = vsel %vm85, %v82, %v78
  %v89 = vsel %vm85, %v84, %v80
  %v90 = vsel %vm51, 1, 0
  %v91 = vsel %vm52, 1, 0
  %v92 = vcvt.s32.f32 %v90
  %v93 = vcvt.s32.f32 %v91
  %v94 = vmul.f32 %v88, %v92
  %v95 = vmul.f32 %v86, %v93
  %v96 = vmul.f32 %v89, %v92
  %v97 = vmul.f32 %v87, %v93
  %98 = vset.pattern.permute.xlu0 1
  %99 = vperm.xlu0 %98, %v21
  %v100 = vpop.permute.xlu0 %99
  %v102 = vmul.f32 %v94, %v100
  %v103 = vmul.f32 %v95, %v100
  %v104 = vmul.f32 %v96, %v100
  %v105 = vmul.f32 %v97, %v100
  %v106 = vadd.f32 %v73, %v102
  %v107 = vadd.f32 %v74, %v103
  %v108 = vadd.f32 %v75, %v104
  %v109 = vadd.f32 %v76, %v105
  %110 = vrot.lane.b32.xlu0 %v17, 15
  %v111 = vpop.permute.xlu0 %110
  %112 = vrot.lane.b32.xlu0 %v19, 15
  %v113 = vpop.permute.xlu0 %112
  %114 = vrot.lane.b32.xlu0 %v18, 15
  %v115 = vpop.permute.xlu0 %114
  %116 = vrot.lane.b32.xlu0 %v20, 15
  %v117 = vpop.permute.xlu0 %116
  %vm118 = vcmp.lt.s32.totalorder %v23, 15
  %v119 = vsel %vm118, %v111, %v115
  %v120 = vsel %vm118, %v113, %v117
  %v121 = vsel %vm118, %v115, %v111
  %v122 = vsel %vm118, %v117, %v113
  %vm123 = vcmp.lt.s32.totalorder %v25, 15
  %vm124 = vcmp.lt.s32.totalorder %v26, 15
  %vm125 = vmand %vm51, %vm123
  %vm126 = vmand %vm52, %vm124
  %v127 = vsel %vm125, 1, 0
  %v128 = vsel %vm126, 1, 0
  %v129 = vcvt.s32.f32 %v127
  %v130 = vcvt.s32.f32 %v128
  %v131 = vmul.f32 %v121, %v129
  %v132 = vmul.f32 %v119, %v130
  %v133 = vmul.f32 %v122, %v129
  %v134 = vmul.f32 %v120, %v130
  %135 = vset.pattern.permute.xlu0 2
  %136 = vperm.xlu0 %135, %v21
  %v137 = vpop.permute.xlu0 %136
  %v139 = vmul.f32 %v131, %v137
  %v140 = vmul.f32 %v132, %v137
  %v141 = vmul.f32 %v133, %v137
  %v142 = vmul.f32 %v134, %v137
  %v143 = vadd.f32 %v106, %v139
  %v144 = vadd.f32 %v107, %v140
  %v145 = vadd.f32 %v108, %v141
  %v146 = vadd.f32 %v109, %v142
  %147 = vrot.lane.b32.xlu0 %v17, 1
  %v148 = vpop.permute.xlu0 %147
  %149 = vrot.lane.b32.xlu0 %v19, 1
  %v150 = vpop.permute.xlu0 %149
  %151 = vrot.lane.b32.xlu0 %v18, 1
  %v152 = vpop.permute.xlu0 %151
  %153 = vrot.lane.b32.xlu0 %v20, 1
  %v154 = vpop.permute.xlu0 %153
  %vm155 = vcmp.lt.s32.totalorder %v23, 1
  %v156 = vsel %vm155, %v148, %v152
  %v157 = vsel %vm155, %v150, %v154
  %v158 = vsel %vm155, %v152, %v148
  %v159 = vsel %vm155, %v154, %v150
  %v160 = vsel %vm53, 1, 0
  %v161 = vsel %vm54, 1, 0
  %v162 = vcvt.s32.f32 %v160
  %v163 = vcvt.s32.f32 %v161
  %v164 = vmul.f32 %v158, %v162
  %v165 = vmul.f32 %v156, %v163
  %v166 = vmul.f32 %v159, %v162
  %v167 = vmul.f32 %v157, %v163
  %168 = vset.pattern.permute.xlu0 3
  %169 = vperm.xlu0 %168, %v21
  %v170 = vpop.permute.xlu0 %169
  %v172 = vmul.f32 %v164, %v170
  %v173 = vmul.f32 %v165, %v170
  %v174 = vmul.f32 %v166, %v170
  %v175 = vmul.f32 %v167, %v170
  %v176 = vadd.f32 %v143, %v172
  %v177 = vadd.f32 %v144, %v173
  %v178 = vadd.f32 %v145, %v174
  %v179 = vadd.f32 %v146, %v175
  %180 = vrot.lane.b32.xlu0 %v17, 127
  %v181 = vpop.permute.xlu0 %180
  %182 = vrot.lane.b32.xlu0 %v19, 127
  %v183 = vpop.permute.xlu0 %182
  %184 = vrot.lane.b32.xlu0 %v18, 127
  %v185 = vpop.permute.xlu0 %184
  %186 = vrot.lane.b32.xlu0 %v20, 127
  %v187 = vpop.permute.xlu0 %186
  %vm188 = vcmp.lt.s32.totalorder %v23, 127
  %v189 = vsel %vm188, %v181, %v185
  %v190 = vsel %vm188, %v183, %v187
  %v191 = vsel %vm188, %v185, %v181
  %v192 = vsel %vm188, %v187, %v183
  %v193 = vsel %vm123, 1, 0
  %v194 = vsel %vm124, 1, 0
  %v195 = vcvt.s32.f32 %v193
  %v196 = vcvt.s32.f32 %v194
  %v197 = vmul.f32 %v189, %v195
  %v198 = vmul.f32 %v191, %v196
  %v199 = vmul.f32 %v190, %v195
  %v200 = vmul.f32 %v192, %v196
  %201 = vset.pattern.permute.xlu0 5
  %202 = vperm.xlu0 %201, %v21
  %v203 = vpop.permute.xlu0 %202
  %v205 = vmul.f32 %v197, %v203
  %v206 = vmul.f32 %v198, %v203
  %v207 = vmul.f32 %v199, %v203
  %v208 = vmul.f32 %v200, %v203
  %v209 = vadd.f32 %v176, %v205
  %v210 = vadd.f32 %v177, %v206
  %v211 = vadd.f32 %v178, %v207
  %v212 = vadd.f32 %v179, %v208
  %213 = vrot.lane.b32.xlu0 %v17, 113
  %v214 = vpop.permute.xlu0 %213
  %215 = vrot.lane.b32.xlu0 %v19, 113
  %v216 = vpop.permute.xlu0 %215
  %217 = vrot.lane.b32.xlu0 %v18, 113
  %v218 = vpop.permute.xlu0 %217
  %219 = vrot.lane.b32.xlu0 %v20, 113
  %v220 = vpop.permute.xlu0 %219
  %vm221 = vcmp.lt.s32.totalorder %v23, 113
  %v222 = vsel %vm221, %v214, %v218
  %v223 = vsel %vm221, %v216, %v220
  %v224 = vsel %vm221, %v218, %v214
  %v225 = vsel %vm221, %v220, %v216
  %vm226 = vcmp.lt.s32.totalorder %v27, 15
  %vm227 = vcmp.lt.s32.totalorder %v28, 15
  %vm228 = vmand %vm226, %vm53
  %vm229 = vmand %vm227, %vm54
  %v230 = vsel %vm228, 1, 0
  %v231 = vsel %vm229, 1, 0
  %v232 = vcvt.s32.f32 %v230
  %v233 = vcvt.s32.f32 %v231
  %v234 = vmul.f32 %v222, %v232
  %v235 = vmul.f32 %v224, %v233
  %v236 = vmul.f32 %v223, %v232
  %v237 = vmul.f32 %v225, %v233
  %238 = vset.pattern.permute.xlu0 6
  %239 = vperm.xlu0 %238, %v21
  %v240 = vpop.permute.xlu0 %239
  %v242 = vmul.f32 %v234, %v240
  %v243 = vmul.f32 %v235, %v240
  %v244 = vmul.f32 %v236, %v240
  %v245 = vmul.f32 %v237, %v240
  %v246 = vadd.f32 %v209, %v242
  %v247 = vadd.f32 %v210, %v243
  %v248 = vadd.f32 %v211, %v244
  %v249 = vadd.f32 %v212, %v245
  %250 = vrot.lane.b32.xlu0 %v17, 112
  %v251 = vpop.permute.xlu0 %250
  %252 = vrot.lane.b32.xlu0 %v19, 112
  %v253 = vpop.permute.xlu0 %252
  %254 = vrot.lane.b32.xlu0 %v18, 112
  %v255 = vpop.permute.xlu0 %254
  %256 = vrot.lane.b32.xlu0 %v20, 112
  %v257 = vpop.permute.xlu0 %256
  %vm258 = vcmp.lt.s32.totalorder %v23, 112
  %v259 = vsel %vm258, %v251, %v255
  %v260 = vsel %vm258, %v253, %v257
  %v261 = vsel %vm258, %v255, %v251
  %v262 = vsel %vm258, %v257, %v253
  %v263 = vsel %vm226, 1, 0
  %v264 = vsel %vm227, 1, 0
  %v265 = vcvt.s32.f32 %v263
  %v266 = vcvt.s32.f32 %v264
  %v267 = vmul.f32 %v259, %v265
  %v268 = vmul.f32 %v261, %v266
  %v269 = vmul.f32 %v260, %v265
  %v270 = vmul.f32 %v262, %v266
  %271 = vset.pattern.permute.xlu0 7
  %272 = vperm.xlu0 %271, %v21
  %v273 = vpop.permute.xlu0 %272
  %v275 = vmul.f32 %v267, %v273
  %v276 = vmul.f32 %v268, %v273
  %v277 = vmul.f32 %v269, %v273
  %v278 = vmul.f32 %v270, %v273
  %v279 = vadd.f32 %v246, %v275
  %v280 = vadd.f32 %v247, %v276
  %v281 = vadd.f32 %v248, %v277
  %v282 = vadd.f32 %v249, %v278
  %283 = vrot.lane.b32.xlu0 %v17, 111
  %v284 = vpop.permute.xlu0 %283
  %285 = vrot.lane.b32.xlu0 %v19, 111
  %v286 = vpop.permute.xlu0 %285
  %287 = vrot.lane.b32.xlu0 %v18, 111
  %v288 = vpop.permute.xlu0 %287
  %289 = vrot.lane.b32.xlu0 %v20, 111
  %v290 = vpop.permute.xlu0 %289
  %vm291 = vcmp.lt.s32.totalorder %v23, 111
  %v292 = vsel %vm291, %v284, %v288
  %v293 = vsel %vm291, %v286, %v290
  %v294 = vsel %vm291, %v288, %v284
  %v295 = vsel %vm291, %v290, %v286
  %vm296 = vmand %vm226, %vm123
  %vm297 = vmand %vm227, %vm124
  %v298 = vsel %vm296, 1, 0
  %v299 = vsel %vm297, 1, 0
  %v300 = vcvt.s32.f32 %v298
  %v301 = vcvt.s32.f32 %v299
  %v302 = vmul.f32 %v292, %v300
  %v303 = vmul.f32 %v294, %v301
  %v304 = vmul.f32 %v293, %v300
  %v305 = vmul.f32 %v295, %v301
  %306 = vset.pattern.permute.xlu0 8
  %307 = vperm.xlu0 %306, %v21
  %v308 = vpop.permute.xlu0 %307
  %v310 = vmul.f32 %v302, %v308
  %v311 = vmul.f32 %v303, %v308
  %v312 = vmul.f32 %v304, %v308
  %v313 = vmul.f32 %v305, %v308
  %v314 = vadd.f32 %v279, %v310
  %v315 = vadd.f32 %v280, %v311
  %v316 = vadd.f32 %v281, %v312
  %v317 = vadd.f32 %v282, %v313
  %v318 = vadd.f32 %v314, %v315
  %319 = vadd.xlane.f32.xlu0 %v318
  %v320 = vpop.xlane.xlu0 %319
  %v321 = vadd.f32 %v316, %v317
  %322 = vadd.xlane.f32.xlu0 %v321
  %v323 = vpop.xlane.xlu0 %322
  %v324 = vadd.f32 %v320, %v323
  %v325 = vmul.f32 %v324, 0.001953125
  %v326 = vsub.f32 %v314, %v325
  %v327 = vsub.f32 %v315, %v325
  %v328 = vsub.f32 %v316, %v325
  %v329 = vsub.f32 %v317, %v325
  %v330 = vmul.f32 %v326, %v326
  %v331 = vmul.f32 %v327, %v327
  %v332 = vmul.f32 %v328, %v328
  %v333 = vmul.f32 %v329, %v329
  %v334 = vadd.f32 %v330, %v331
  %335 = vadd.xlane.f32.xlu0 %v334
  %v336 = vpop.xlane.xlu0 %335
  %v337 = vadd.f32 %v332, %v333
  %338 = vadd.xlane.f32.xlu0 %v337
  %v339 = vpop.xlane.xlu0 %338
  %v340 = vadd.f32 %v336, %v339
  %v341 = vmul.f32 %v340, 0.001953125
  %v342 = vld [vmem:[%s3] sm:$0xff]
  %v343 = vadd.f32 %v341, 1e-05
  %v344 = vrsqrt.pop %v343
  %v345 = vmul.f32 %v342, %v344
  %347 = vset.pattern.permute.xlu0 0
  %348 = vperm.xlu0 %347, %v345
  %v349 = vpop.permute.xlu0 %348
  %v351 = vmul.f32 %v326, %v349
  %v352 = vmul.f32 %v327, %v349
  %v353 = vmul.f32 %v328, %v349
  %v354 = vmul.f32 %v329, %v349
  %356 = vset.pattern.permute.xlu0 1
  %357 = vperm.xlu0 %356, %v342
  %v358 = vpop.permute.xlu0 %357
  %v360 = vadd.f32 %v351, %v358
  %v361 = vadd.f32 %v352, %v358
  %v362 = vadd.f32 %v353, %v358
  %v363 = vadd.f32 %v354, %v358
  %v364 = vmax.f32 %v360, 0.0
  %v365 = vmax.f32 %v361, 0.0
  %v366 = vmax.f32 %v362, 0.0
  %v367 = vmax.f32 %v363, 0.0
  %v368 = vld [vmem:[%s2] sm:$0xff]
  %v369 = vld [vmem:[%s2 + $0x8] sm:$0xff]
  %v370 = vlaneseq
  %v371 = vshrl.u32 %v370, 7
  %v372 = vsub.s32 0, %v371
  %v373 = vrot.slane %v364, %v372
  %v374 = vlaneseq
  %v375 = vshrl.u32 %v374, 7
  %v376 = vsub.s32 0, %v375
  %v377 = vrot.slane %v365, %v376
  %v378 = vlaneseq
  %v379 = vshrl.u32 %v378, 7
  %v380 = vsub.s32 0, %v379
  %v381 = vrot.slane %v366, %v380
  %v382 = vlaneseq
  %v383 = vshrl.u32 %v382, 7
  %v384 = vsub.s32 0, %v383
  %v385 = vrot.slane %v367, %v384
  %387 = vset.pattern.permute.xlu0 0
  %388 = vperm.xlu0 %387, %v368
  %v389 = vpop.permute.xlu0 %388
  %392 = vset.pattern.permute.xlu0 0
  %393 = vperm.xlu0 %392, %v369
  %v394 = vpop.permute.xlu0 %393
  %v396 = vmul.f32 %v373, %v389
  %v397 = vmul.f32 %v377, %v389
  %v398 = vmul.f32 %v373, %v394
  %v399 = vmul.f32 %v377, %v394
  %v400 = vmul.f32 %v381, %v389
  %v401 = vmul.f32 %v385, %v389
  %v402 = vmul.f32 %v381, %v394
  %v403 = vmul.f32 %v385, %v394
  %v404 = vlaneseq
  %v405 = vshrl.u32 %v404, 7
  %v406 = vsub.s32 1, %v405
  %v407 = vrot.slane %v364, %v406
  %v408 = vlaneseq
  %v409 = vshrl.u32 %v408, 7
  %v410 = vsub.s32 1, %v409
  %v411 = vrot.slane %v365, %v410
  %v412 = vlaneseq
  %v413 = vshrl.u32 %v412, 7
  %v414 = vsub.s32 1, %v413
  %v415 = vrot.slane %v366, %v414
  %v416 = vlaneseq
  %v417 = vshrl.u32 %v416, 7
  %v418 = vsub.s32 1, %v417
  %v419 = vrot.slane %v367, %v418
  %420 = vset.pattern.permute.xlu0 1
  %421 = vperm.xlu0 %420, %v368
  %v422 = vpop.permute.xlu0 %421
  %424 = vset.pattern.permute.xlu0 1
  %425 = vperm.xlu0 %424, %v369
  %v426 = vpop.permute.xlu0 %425
  %v428 = vmul.f32 %v407, %v422
  %v429 = vmul.f32 %v411, %v422
  %v430 = vmul.f32 %v407, %v426
  %v431 = vmul.f32 %v411, %v426
  %v432 = vmul.f32 %v415, %v422
  %v433 = vmul.f32 %v419, %v422
  %v434 = vmul.f32 %v415, %v426
  %v435 = vmul.f32 %v419, %v426
  %v436 = vadd.f32 %v396, %v428
  %v437 = vadd.f32 %v397, %v429
  %v438 = vadd.f32 %v398, %v430
  %v439 = vadd.f32 %v399, %v431
  %v440 = vadd.f32 %v400, %v432
  %v441 = vadd.f32 %v401, %v433
  %v442 = vadd.f32 %v402, %v434
  %v443 = vadd.f32 %v403, %v435
  %v444 = vlaneseq
  %v445 = vshrl.u32 %v444, 7
  %v446 = vsub.s32 2, %v445
  %v447 = vrot.slane %v364, %v446
  %v448 = vlaneseq
  %v449 = vshrl.u32 %v448, 7
  %v450 = vsub.s32 2, %v449
  %v451 = vrot.slane %v365, %v450
  %v452 = vlaneseq
  %v453 = vshrl.u32 %v452, 7
  %v454 = vsub.s32 2, %v453
  %v455 = vrot.slane %v366, %v454
  %v456 = vlaneseq
  %v457 = vshrl.u32 %v456, 7
  %v458 = vsub.s32 2, %v457
  %v459 = vrot.slane %v367, %v458
  %460 = vset.pattern.permute.xlu0 2
  %461 = vperm.xlu0 %460, %v368
  %v462 = vpop.permute.xlu0 %461
  %464 = vset.pattern.permute.xlu0 2
  %465 = vperm.xlu0 %464, %v369
  %v466 = vpop.permute.xlu0 %465
  %v468 = vmul.f32 %v447, %v462
  %v469 = vmul.f32 %v451, %v462
  %v470 = vmul.f32 %v447, %v466
  %v471 = vmul.f32 %v451, %v466
  %v472 = vmul.f32 %v455, %v462
  %v473 = vmul.f32 %v459, %v462
  %v474 = vmul.f32 %v455, %v466
  %v475 = vmul.f32 %v459, %v466
  %v476 = vadd.f32 %v436, %v468
  %v477 = vadd.f32 %v437, %v469
  %v478 = vadd.f32 %v438, %v470
  %v479 = vadd.f32 %v439, %v471
  %v480 = vadd.f32 %v440, %v472
  %v481 = vadd.f32 %v441, %v473
  %v482 = vadd.f32 %v442, %v474
  %v483 = vadd.f32 %v443, %v475
  %v484 = vlaneseq
  %v485 = vshrl.u32 %v484, 7
  %v486 = vsub.s32 3, %v485
  %v487 = vrot.slane %v364, %v486
  %v488 = vlaneseq
  %v489 = vshrl.u32 %v488, 7
  %v490 = vsub.s32 3, %v489
  %v491 = vrot.slane %v365, %v490
  %v492 = vlaneseq
  %v493 = vshrl.u32 %v492, 7
  %v494 = vsub.s32 3, %v493
  %v495 = vrot.slane %v366, %v494
  %v496 = vlaneseq
  %v497 = vshrl.u32 %v496, 7
  %v498 = vsub.s32 3, %v497
  %v499 = vrot.slane %v367, %v498
  %500 = vset.pattern.permute.xlu0 3
  %501 = vperm.xlu0 %500, %v368
  %v502 = vpop.permute.xlu0 %501
  %504 = vset.pattern.permute.xlu0 3
  %505 = vperm.xlu0 %504, %v369
  %v506 = vpop.permute.xlu0 %505
  %v508 = vmul.f32 %v487, %v502
  %v509 = vmul.f32 %v491, %v502
  %v510 = vmul.f32 %v487, %v506
  %v511 = vmul.f32 %v491, %v506
  %v512 = vmul.f32 %v495, %v502
  %v513 = vmul.f32 %v499, %v502
  %v514 = vmul.f32 %v495, %v506
  %v515 = vmul.f32 %v499, %v506
  %v516 = vadd.f32 %v476, %v508
  %v517 = vadd.f32 %v477, %v509
  %v518 = vadd.f32 %v478, %v510
  %v519 = vadd.f32 %v479, %v511
  %v520 = vadd.f32 %v480, %v512
  %v521 = vadd.f32 %v481, %v513
  %v522 = vadd.f32 %v482, %v514
  %v523 = vadd.f32 %v483, %v515
  %v524 = vlaneseq
  %v525 = vshrl.u32 %v524, 7
  %v526 = vsub.s32 4, %v525
  %v527 = vrot.slane %v364, %v526
  %v528 = vlaneseq
  %v529 = vshrl.u32 %v528, 7
  %v530 = vsub.s32 4, %v529
  %v531 = vrot.slane %v365, %v530
  %v532 = vlaneseq
  %v533 = vshrl.u32 %v532, 7
  %v534 = vsub.s32 4, %v533
  %v535 = vrot.slane %v366, %v534
  %v536 = vlaneseq
  %v537 = vshrl.u32 %v536, 7
  %v538 = vsub.s32 4, %v537
  %v539 = vrot.slane %v367, %v538
  %540 = vset.pattern.permute.xlu0 4
  %541 = vperm.xlu0 %540, %v368
  %v542 = vpop.permute.xlu0 %541
  %544 = vset.pattern.permute.xlu0 4
  %545 = vperm.xlu0 %544, %v369
  %v546 = vpop.permute.xlu0 %545
  %v548 = vmul.f32 %v527, %v542
  %v549 = vmul.f32 %v531, %v542
  %v550 = vmul.f32 %v527, %v546
  %v551 = vmul.f32 %v531, %v546
  %v552 = vmul.f32 %v535, %v542
  %v553 = vmul.f32 %v539, %v542
  %v554 = vmul.f32 %v535, %v546
  %v555 = vmul.f32 %v539, %v546
  %v556 = vadd.f32 %v516, %v548
  %v557 = vadd.f32 %v517, %v549
  %v558 = vadd.f32 %v518, %v550
  %v559 = vadd.f32 %v519, %v551
  %v560 = vadd.f32 %v520, %v552
  %v561 = vadd.f32 %v521, %v553
  %v562 = vadd.f32 %v522, %v554
  %v563 = vadd.f32 %v523, %v555
  %v564 = vlaneseq
  %v565 = vshrl.u32 %v564, 7
  %v566 = vsub.s32 5, %v565
  %v567 = vrot.slane %v364, %v566
  %v568 = vlaneseq
  %v569 = vshrl.u32 %v568, 7
  %v570 = vsub.s32 5, %v569
  %v571 = vrot.slane %v365, %v570
  %v572 = vlaneseq
  %v573 = vshrl.u32 %v572, 7
  %v574 = vsub.s32 5, %v573
  %v575 = vrot.slane %v366, %v574
  %v576 = vlaneseq
  %v577 = vshrl.u32 %v576, 7
  %v578 = vsub.s32 5, %v577
  %v579 = vrot.slane %v367, %v578
  %580 = vset.pattern.permute.xlu0 5
  %581 = vperm.xlu0 %580, %v368
  %v582 = vpop.permute.xlu0 %581
  %584 = vset.pattern.permute.xlu0 5
  %585 = vperm.xlu0 %584, %v369
  %v586 = vpop.permute.xlu0 %585
  %v588 = vmul.f32 %v567, %v582
  %v589 = vmul.f32 %v571, %v582
  %v590 = vmul.f32 %v567, %v586
  %v591 = vmul.f32 %v571, %v586
  %v592 = vmul.f32 %v575, %v582
  %v593 = vmul.f32 %v579, %v582
  %v594 = vmul.f32 %v575, %v586
  %v595 = vmul.f32 %v579, %v586
  %v596 = vadd.f32 %v556, %v588
  %v597 = vadd.f32 %v557, %v589
  %v598 = vadd.f32 %v558, %v590
  %v599 = vadd.f32 %v559, %v591
  %v600 = vadd.f32 %v560, %v592
  %v601 = vadd.f32 %v561, %v593
  %v602 = vadd.f32 %v562, %v594
  %v603 = vadd.f32 %v563, %v595
  %v604 = vlaneseq
  %v605 = vshrl.u32 %v604, 7
  %v606 = vsub.s32 6, %v605
  %v607 = vrot.slane %v364, %v606
  %v608 = vlaneseq
  %v609 = vshrl.u32 %v608, 7
  %v610 = vsub.s32 6, %v609
  %v611 = vrot.slane %v365, %v610
  %v612 = vlaneseq
  %v613 = vshrl.u32 %v612, 7
  %v614 = vsub.s32 6, %v613
  %v615 = vrot.slane %v366, %v614
  %v616 = vlaneseq
  %v617 = vshrl.u32 %v616, 7
  %v618 = vsub.s32 6, %v617
  %v619 = vrot.slane %v367, %v618
  %620 = vset.pattern.permute.xlu0 6
  %621 = vperm.xlu0 %620, %v368
  %v622 = vpop.permute.xlu0 %621
  %624 = vset.pattern.permute.xlu0 6
  %625 = vperm.xlu0 %624, %v369
  %v626 = vpop.permute.xlu0 %625
  %v628 = vmul.f32 %v607, %v622
  %v629 = vmul.f32 %v611, %v622
  %v630 = vmul.f32 %v607, %v626
  %v631 = vmul.f32 %v611, %v626
  %v632 = vmul.f32 %v615, %v622
  %v633 = vmul.f32 %v619, %v622
  %v634 = vmul.f32 %v615, %v626
  %v635 = vmul.f32 %v619, %v626
  %v636 = vadd.f32 %v596, %v628
  %v637 = vadd.f32 %v597, %v629
  %v638 = vadd.f32 %v598, %v630
  %v639 = vadd.f32 %v599, %v631
  %v640 = vadd.f32 %v600, %v632
  %v641 = vadd.f32 %v601, %v633
  %v642 = vadd.f32 %v602, %v634
  %v643 = vadd.f32 %v603, %v635
  %v644 = vlaneseq
  %v645 = vshrl.u32 %v644, 7
  %v646 = vsub.s32 7, %v645
  %v647 = vrot.slane %v364, %v646
  %v648 = vlaneseq
  %v649 = vshrl.u32 %v648, 7
  %v650 = vsub.s32 7, %v649
  %v651 = vrot.slane %v365, %v650
  %v652 = vlaneseq
  %v653 = vshrl.u32 %v652, 7
  %v654 = vsub.s32 7, %v653
  %v655 = vrot.slane %v366, %v654
  %v656 = vlaneseq
  %v657 = vshrl.u32 %v656, 7
  %v658 = vsub.s32 7, %v657
  %v659 = vrot.slane %v367, %v658
  %660 = vset.pattern.permute.xlu0 7
  %661 = vperm.xlu0 %660, %v368
  %v662 = vpop.permute.xlu0 %661
  %664 = vset.pattern.permute.xlu0 7
  %665 = vperm.xlu0 %664, %v369
  %v666 = vpop.permute.xlu0 %665
  %v668 = vmul.f32 %v647, %v662
  %v669 = vmul.f32 %v651, %v662
  %v670 = vmul.f32 %v647, %v666
  %v671 = vmul.f32 %v651, %v666
  %v672 = vmul.f32 %v655, %v662
  %v673 = vmul.f32 %v659, %v662
  %v674 = vmul.f32 %v655, %v666
  %v675 = vmul.f32 %v659, %v666
  %v676 = vadd.f32 %v636, %v668
  %v677 = vadd.f32 %v637, %v669
  %v678 = vadd.f32 %v638, %v670
  %v679 = vadd.f32 %v639, %v671
  %v680 = vadd.f32 %v640, %v672
  %v681 = vadd.f32 %v641, %v673
  %v682 = vadd.f32 %v642, %v674
  %v683 = vadd.f32 %v643, %v675
  %v684 = vadd.f32 %v676, %v677
  %685 = vadd.xlane.f32.xlu0 %v684
  %v686 = vpop.xlane.xlu0 %685
  %v687 = vadd.f32 %v678, %v679
  %688 = vadd.xlane.f32.xlu0 %v687
  %v689 = vpop.xlane.xlu0 %688
  %v690 = vadd.f32 %v680, %v681
  %691 = vadd.xlane.f32.xlu0 %v690
  %v692 = vpop.xlane.xlu0 %691
  %v693 = vadd.f32 %v682, %v683
  %694 = vadd.xlane.f32.xlu0 %v693
  %v695 = vpop.xlane.xlu0 %694
  %v696 = vadd.f32 %v686, %v692
  %v697 = vadd.f32 %v689, %v695
  %v698 = vmul.f32 %v696, 0.001953125
  %v699 = vmul.f32 %v697, 0.001953125
  %v700 = vsub.f32 %v676, %v698
  %v701 = vsub.f32 %v677, %v698
  %v702 = vsub.f32 %v678, %v699
  %v703 = vsub.f32 %v679, %v699
  %v704 = vsub.f32 %v680, %v698
  %v705 = vsub.f32 %v681, %v698
  %v706 = vsub.f32 %v682, %v699
  %v707 = vsub.f32 %v683, %v699
  %v708 = vmul.f32 %v700, %v700
  %v709 = vmul.f32 %v701, %v701
  %v710 = vmul.f32 %v702, %v702
  %v711 = vmul.f32 %v703, %v703
  %v712 = vmul.f32 %v704, %v704
  %v713 = vmul.f32 %v705, %v705
  %v714 = vmul.f32 %v706, %v706
  %v715 = vmul.f32 %v707, %v707
  %v716 = vadd.f32 %v708, %v709
  %717 = vadd.xlane.f32.xlu0 %v716
  %v718 = vpop.xlane.xlu0 %717
  %v719 = vadd.f32 %v710, %v711
  %720 = vadd.xlane.f32.xlu0 %v719
  %v721 = vpop.xlane.xlu0 %720
  %v722 = vadd.f32 %v712, %v713
  %723 = vadd.xlane.f32.xlu0 %v722
  %v724 = vpop.xlane.xlu0 %723
  %v725 = vadd.f32 %v714, %v715
  %726 = vadd.xlane.f32.xlu0 %v725
  %v727 = vpop.xlane.xlu0 %726
  %v728 = vadd.f32 %v718, %v724
  %v729 = vadd.f32 %v721, %v727
  %v730 = vmul.f32 %v728, 0.001953125
  %v731 = vmul.f32 %v729, 0.001953125
  %v732 = vld [vmem:[%s3] sm:$0xff]
  %v733 = vld [vmem:[%s3 + $0x8] sm:$0xff]
  %v734 = vadd.f32 %v730, 1e-05
  %v735 = vadd.f32 %v731, 1e-05
  %v736 = vrsqrt.pop %v734
  %v737 = vrsqrt.pop %v735
  %v738 = vmul.f32 %v732, %v736
  %v739 = vmul.f32 %v733, %v737
  %741 = vset.pattern.permute.xlu0 2
  %742 = vperm.xlu0 %741, %v738
  %v743 = vpop.permute.xlu0 %742
  %746 = vset.pattern.permute.xlu0 2
  %747 = vperm.xlu0 %746, %v739
  %v748 = vpop.permute.xlu0 %747
  %v750 = vmul.f32 %v700, %v743
  %v751 = vmul.f32 %v701, %v743
  %v752 = vmul.f32 %v702, %v748
  %v753 = vmul.f32 %v703, %v748
  %v754 = vmul.f32 %v704, %v743
  %v755 = vmul.f32 %v705, %v743
  %v756 = vmul.f32 %v706, %v748
  %v757 = vmul.f32 %v707, %v748
  %759 = vset.pattern.permute.xlu0 3
  %760 = vperm.xlu0 %759, %v732
  %v761 = vpop.permute.xlu0 %760
  %764 = vset.pattern.permute.xlu0 3
  %765 = vperm.xlu0 %764, %v733
  %v766 = vpop.permute.xlu0 %765
  %v768 = vadd.f32 %v750, %v761
  %v769 = vadd.f32 %v751, %v761
  %v770 = vadd.f32 %v752, %v766
  %v771 = vadd.f32 %v753, %v766
  %v772 = vadd.f32 %v754, %v761
  %v773 = vadd.f32 %v755, %v761
  %v774 = vadd.f32 %v756, %v766
  %v775 = vadd.f32 %v757, %v766
  %v776 = vmax.f32 %v768, 0.0
  %v777 = vmax.f32 %v769, 0.0
  %v778 = vmax.f32 %v770, 0.0
  %v779 = vmax.f32 %v771, 0.0
  %v780 = vmax.f32 %v772, 0.0
  %v781 = vmax.f32 %v773, 0.0
  %v782 = vmax.f32 %v774, 0.0
  %v783 = vmax.f32 %v775, 0.0
  %784 = vst [vmem:[%s4] sm:$0xff] %v776
  %785 = vst [vmem:[%s4 + $0x8] sm:$0xff] %v777
  %786 = vst [vmem:[%s4 + $0x10] sm:$0xff] %v778
  %787 = vst [vmem:[%s4 + $0x18] sm:$0xff] %v779
  %788 = vst [vmem:[%s4 + $0x20] sm:$0xff] %v780
  %789 = vst [vmem:[%s4 + $0x28] sm:$0xff] %v781
  %790 = vst [vmem:[%s4 + $0x30] sm:$0xff] %v782
  %791 = vst [vmem:[%s4 + $0x38] sm:$0xff] %v783
  // Predicated region
  $region18: #{dsconv_forward.1} parent=0 // pred_check
    _
  $region19: #{dsconv_forward.1} parent=0 // pred_check_branch
    %793 = sbr.rel (0) target = $region21
  $region20: #{dsconv_forward.1} parent=0 // pred_region
    _
  $region21: #{dsconv_forward.1} parent=0 // pred_fallthru
    _
  // Predicated region
  $region22: #{dsconv_forward.1} parent=0 // pred_check
    _
  $region23: #{dsconv_forward.1} parent=0 // pred_check_branch
    %795 = sbr.rel (0) target = $region25
  $region24: #{dsconv_forward.1} parent=0 // pred_region
    _
  $region25: #{dsconv_forward.1} parent=0 // pred_fallthru
    _

</llo_original>
